<compile_context>
chip_gen: v7x
topology: tpu7x:2x2x1
jax: 0.10.0
libtpu: 0.0.40
codegen_flags: <defaults>
</compile_context>

<pallas_src>
import functools
import math

import jax
import jax.numpy as jnp
import numpy as np
from jax.experimental import pallas as pl
from jax.experimental.pallas import tpu as pltpu


def _round_up(x, m):
    return ((x + m - 1) // m) * m


def _vmem_capacity_bytes():
    try:
        cap = getattr(pltpu.get_tpu_info(), "vmem_capacity_bytes", None)
        if cap:
            return int(cap)
    except Exception:
        pass
    return 64 * 1024 * 1024  # conservative default (v7x per-TC VMEM)


def build_dense_adjacency(row, col, values, shape, dataset="sample"):
    """COO -> dense float32 adjacency (torch.sparse.FloatTensor equivalent).

    Build this ONCE per adjacency and reuse it across forward calls: the
    O(N^2) densification must not sit on the per-forward hot path.
    Duplicate indices are summed (matches sparse coalescing); 'Nowplaying'
    drops entries with value < 0.05 (zeroing is equivalent once dense).
    """
    values = jnp.asarray(values, jnp.float32)
    if dataset == "Nowplaying":
        values = jnp.where(values < 0.05, 0.0, values)
    return jnp.zeros(shape, jnp.float32).at[
        jnp.asarray(row, jnp.int32), jnp.asarray(col, jnp.int32)
    ].add(values)


# ---------------- resident path: whole problem stays in VMEM ----------------

def _resident_kernel(a_ref, x_ref, o_ref, *, layers):
    """o = sum_{l=0..layers} A^l @ X.  a_ref: (Np,Np) bf16; x/o: (Np,Dp) f32."""
    a = a_ref[...]                       # bf16 MXU operand
    x32 = x_ref[...]                     # f32 layer-0 term (kept exact)
    acc = x32
    xb = x32.astype(jnp.bfloat16)
    for _ in range(layers):              # small static unroll (layers <= ~4)
        y = jnp.dot(a, xb, preferred_element_type=jnp.float32)
        acc = acc + y                    # f32 adds (no bf16 VPU work on v5e)
        xb = y.astype(jnp.bfloat16)
    o_ref[...] = acc


def _resident_call(adj_bf16, x_f32, layers, vmem_limit):
    np_, dp = x_f32.shape
    cost = pl.CostEstimate(
        flops=2 * layers * np_ * np_ * dp,
        transcendentals=0,
        bytes_accessed=np_ * np_ * 2 + 2 * np_ * dp * 4,
    )
    kernel = functools.partial(_resident_kernel, layers=layers)
    return pl.pallas_call(
        kernel,
        out_shape=jax.ShapeDtypeStruct((np_, dp), jnp.float32),
        grid=(1,),
        in_specs=[
            pl.BlockSpec((np_, np_), lambda i: (0, 0)),   # full adjacency
            pl.BlockSpec((np_, dp), lambda i: (0, 0)),    # full embedding
        ],
        out_specs=pl.BlockSpec((np_, dp), lambda i: (0, 0)),
        compiler_params=pltpu.CompilerParams(
            dimension_semantics=("arbitrary",),
            vmem_limit_bytes=vmem_limit,
        ),
        cost_estimate=cost,
    )(adj_bf16, x_f32)


# -------- tiled path: stream A from HBM, fused layer step per call ----------

def _fused_layer_kernel(a_ref, x_ref, acc_in_ref, y_ref, acc_out_ref, acc_sc):
    """One fused layer step: y = A @ x ; acc_out = acc_in + y.

    Grid = (rows, k) with the reduction axis (k) innermost.
    a_ref: (tm, tk) bf16, x_ref: (tk, Dp) bf16,
    acc_in/acc_out: (tm, Dp) f32 (running layer sum), y_ref: (tm, Dp) bf16.
    acc_in / y / acc_out blocks are indexed by the row axis only, so the
    pipeline DMAs them exactly once per output tile (not once per k step).
    """
    @pl.when(pl.program_id(1) == 0)
    def _():
        acc_sc[...] = jnp.zeros_like(acc_sc)

    acc_sc[...] += jnp.dot(a_ref[...], x_ref[...],
                           preferred_element_type=jnp.float32)

    @pl.when(pl.program_id(1) == pl.num_programs(1) - 1)
    def _():
        y = acc_sc[...]
        acc_out_ref[...] = acc_in_ref[...] + y          # f32 layer sum
        y_ref[...] = y.astype(y_ref.dtype)              # bf16 next-layer input


def _make_fused_layer_step(np_, dp, tm, tk, vmem_limit):
    cost = pl.CostEstimate(
        flops=2 * np_ * np_ * dp,
        transcendentals=0,
        bytes_accessed=(np_ * np_ * 2                     # A (bf16)
                        + (np_ // tm) * np_ * dp * 2      # x slab re-fetches
                        + 2 * np_ * dp * 4                # acc in/out (f32)
                        + np_ * dp * 2),                  # y (bf16)
    )
    return pl.pallas_call(
        _fused_layer_kernel,
        out_shape=(jax.ShapeDtypeStruct((np_, dp), jnp.bfloat16),
                   jax.ShapeDtypeStruct((np_, dp), jnp.float32)),
        grid_spec=pltpu.PrefetchScalarGridSpec(
            num_scalar_prefetch=0,
            grid=(np_ // tm, np_ // tk),                     # reduction last
            in_specs=[
                pl.BlockSpec((tm, tk), lambda i, k: (i, k)),   # A streamed
                pl.BlockSpec((tk, dp), lambda i, k: (k, 0)),   # x slab (small)
                pl.BlockSpec((tm, dp), lambda i, k: (i, 0)),   # running sum in
            ],
            out_specs=[
                pl.BlockSpec((tm, dp), lambda i, k: (i, 0)),   # y (bf16)
                pl.BlockSpec((tm, dp), lambda i, k: (i, 0)),   # running sum out
            ],
            scratch_shapes=[pltpu.VMEM((tm, dp), jnp.float32)],
        ),
        compiler_params=pltpu.CompilerParams(
            # row axis parallel -> v7x's 2 TensorCores split the output rows
            dimension_semantics=("parallel", "arbitrary"),
            vmem_limit_bytes=vmem_limit,
        ),
        cost_estimate=cost,
    )


# ---------------- forward wrapper ----------------

def hyperconv_forward(adj_dense, embedding, *, layers, tm=512, tk=512,
                      force_tiled=False):
    """JAX/Pallas HyperConv.forward.

    adj_dense: (N, N) float32 dense adjacency (see build_dense_adjacency).
    embedding: (N, emb_size).  Returns (N, emb_size) float32.
    """
    adj_dense = jnp.asarray(adj_dense, jnp.float32)
    embedding = jnp.asarray(embedding, jnp.float32)
    n, d = embedding.shape
    assert adj_dense.shape == (n, n)

    dp = max(128, _round_up(d, 128))           # lane-dense embedding dim
    capacity = _vmem_capacity_bytes()
    budget = capacity // 2                     # headroom for compiler scratch

    # Resident-A cutoff: bf16 A + f32 X/out, x2 for the pipeline's double
    # buffers, plus in-kernel f32 temporaries.
    np_res = _round_up(n, 128)
    resident_bytes = (2 * np_res * np_res * 2      # A (bf16, 2 buffers)
                      + 4 * np_res * dp * 4        # X + out (f32, 2 buffers)
                      + 3 * np_res * dp * 4)       # acc / y / xb temporaries
    use_resident = (not force_tiled) and resident_bytes <= budget

    if use_resident:
        np_ = np_res
        adj_p = jnp.pad(adj_dense,
                        ((0, np_ - n), (0, np_ - n))).astype(jnp.bfloat16)
        x_p = jnp.pad(embedding, ((0, np_ - n), (0, dp - d)))     # f32
        vmem_limit = min(max(resident_bytes + (8 << 20), 32 << 20),
                         capacity, 128 << 20)
        out = _resident_call(adj_p, x_p, layers, vmem_limit)
        return out[:n, :d]

    # Tiled / streamed path (large catalogs, or forced).
    step = math.lcm(tm, tk)
    np_ = _round_up(max(n, step), step)
    tm = min(tm, np_)
    tk = min(tk, np_)
    adj_p = jnp.pad(adj_dense,
                    ((0, np_ - n), (0, np_ - n))).astype(jnp.bfloat16)
    x0 = jnp.pad(embedding, ((0, np_ - n), (0, dp - d)))          # f32

    block_bytes = (2 * tm * tk * 2            # A block (bf16), double-buffered
                   + 2 * tk * dp * 2          # x slab (bf16)
                   + 2 * tm * dp * 4          # acc_in (f32)
                   + 2 * tm * dp * 2          # y out (bf16)
                   + 2 * tm * dp * 4          # acc_out (f32)
                   + tm * dp * 4)             # f32 scratch accumulator
    vmem_limit = min(max(block_bytes + (8 << 20), 32 << 20),
                     capacity, 128 << 20)
    layer_step = _make_fused_layer_step(np_, dp, tm, tk, vmem_limit)

    acc = x0                              # f32 layer-0 term (exact)
    x = x0.astype(jnp.bfloat16)
    for _ in range(layers):
        x, acc = layer_step(adj_p, x, acc)   # fused: y=A@x, acc+=y, bf16 cast
    return acc[:n, :d]


def hyperconv_reference(adj_dense, embedding, *, layers):
    """Pure-JAX f32 reference of the same computation."""
    adj = jnp.asarray(adj_dense, jnp.float32)
    x = jnp.asarray(embedding, jnp.float32)
    acc = x
    for _ in range(layers):
        x = adj @ x
        acc = acc + x
    return acc


if __name__ == "__main__":
    key = jax.random.PRNGKey(0)

    def make_problem(k, n, emb, nnz):
        k_row, k_col, k_val, k_emb = jax.random.split(k, 4)
        row = jax.random.randint(k_row, (nnz,), 0, n, dtype=jnp.int32)
        col = jax.random.randint(k_col, (nnz,), 0, n, dtype=jnp.int32)
        vals = jax.random.uniform(k_val, (nnz,), jnp.float32, 0.0, 0.2)
        emb_tbl = jax.random.normal(k_emb, (n, emb), jnp.float32)
        return row, col, vals, emb_tbl

    k1, k2 = jax.random.split(key)

    # 1) Small problem -> resident-A path (A kept in VMEM across all layers).
    N, EMB, LAYERS, NNZ = 64, 32, 3, 256
    row, col, vals, emb_tbl = make_problem(k1, N, EMB, NNZ)
    adj = build_dense_adjacency(row, col, vals, (N, N), dataset="sample")
    out = jax.block_until_ready(hyperconv_forward(adj, emb_tbl, layers=LAYERS))
    ref = jax.block_until_ready(hyperconv_reference(adj, emb_tbl, layers=LAYERS))
    # bf16 MXU operands vs f32 reference -> loose tolerance.
    np.testing.assert_allclose(np.asarray(out), np.asarray(ref),
                               rtol=2e-2, atol=2e-2)

    # 2) Exercise the tiled/streamed path (what large catalogs use); small
    #    tiles just to get a real (row x k) grid, plus the Nowplaying filter.
    N2, EMB2, LAYERS2, NNZ2 = 200, 100, 2, 1200
    row2, col2, vals2, emb2 = make_problem(k2, N2, EMB2, NNZ2)
    adj2 = build_dense_adjacency(row2, col2, vals2, (N2, N2),
                                 dataset="Nowplaying")
    out2 = jax.block_until_ready(
        hyperconv_forward(adj2, emb2, layers=LAYERS2, tm=128, tk=128,
                          force_tiled=True))
    ref2 = jax.block_until_ready(
        hyperconv_reference(adj2, emb2, layers=LAYERS2))
    np.testing.assert_allclose(np.asarray(out2), np.asarray(ref2),
                               rtol=2e-2, atol=2e-2)

    print("KERNEL_OK")
</pallas_src>

<mosaic_0001>
module attributes {stable_mosaic.version = 11 : i64} {
  func.func @_resident_kernel(%arg0: i32, %arg1: memref<128x128xbf16, #tpu.memory_space<vmem>>, %arg2: memref<128x128xf32, #tpu.memory_space<vmem>>, %arg3: memref<128x128xf32, #tpu.memory_space<vmem>>) attributes {dimension_semantics = [#tpu.dimension_semantics<arbitrary>], iteration_bounds = array<i64: 1>, scalar_prefetch = 0 : i64, scratch_operands = 0 : i64, tpu.core_type = #tpu.core_type<tc>, window_params = [{pipeline_mode = #tpu.pipeline_mode<synchronous>, transform_indices = @transform_0, window_bounds = array<i64: 128, 128>}, {pipeline_mode = #tpu.pipeline_mode<synchronous>, transform_indices = @transform_1, window_bounds = array<i64: 128, 128>}, {pipeline_mode = #tpu.pipeline_mode<synchronous>, transform_indices = @transform_2, window_bounds = array<i64: 128, 128>}]} {
    %c0 = arith.constant 0 : index
    %c0_0 = arith.constant 0 : index
    %0 = vector.load %arg1[%c0, %c0_0] : memref<128x128xbf16, #tpu.memory_space<vmem>>, vector<128x128xbf16>
    %c0_1 = arith.constant 0 : index
    %c0_2 = arith.constant 0 : index
    %1 = vector.load %arg2[%c0_1, %c0_2] : memref<128x128xf32, #tpu.memory_space<vmem>>, vector<128x128xf32>
    %2 = arith.truncf %1 : vector<128x128xf32> to vector<128x128xbf16>
    %cst = arith.constant dense<0.000000e+00> : vector<128x128xf32>
    %3 = tpu.matmul %0, %2, %cst {dimension_numbers = #tpu.dot_dimension_numbers<[1], [0], [0], [1], [0, 0, 1, 1], [], []>} : vector<128x128xbf16>, vector<128x128xbf16>, vector<128x128xf32> -> vector<128x128xf32>
    %4 = arith.addf %1, %3 : vector<128x128xf32>
    %5 = arith.truncf %3 : vector<128x128xf32> to vector<128x128xbf16>
    %cst_3 = arith.constant dense<0.000000e+00> : vector<128x128xf32>
    %6 = tpu.matmul %0, %5, %cst_3 {dimension_numbers = #tpu.dot_dimension_numbers<[1], [0], [0], [1], [0, 0, 1, 1], [], []>} : vector<128x128xbf16>, vector<128x128xbf16>, vector<128x128xf32> -> vector<128x128xf32>
    %7 = arith.addf %4, %6 : vector<128x128xf32>
    %8 = arith.truncf %6 : vector<128x128xf32> to vector<128x128xbf16>
    %cst_4 = arith.constant dense<0.000000e+00> : vector<128x128xf32>
    %9 = tpu.matmul %0, %8, %cst_4 {dimension_numbers = #tpu.dot_dimension_numbers<[1], [0], [0], [1], [0, 0, 1, 1], [], []>} : vector<128x128xbf16>, vector<128x128xbf16>, vector<128x128xf32> -> vector<128x128xf32>
    %10 = arith.addf %7, %9 : vector<128x128xf32>
    %c0_5 = arith.constant 0 : index
    %c0_6 = arith.constant 0 : index
    %11 = vector.load %arg3[%c0_5, %c0_6] : memref<128x128xf32, #tpu.memory_space<vmem>>, vector<128x128xf32>
    tpu.vector_store %arg3[%c0_5, %c0_6], %10 {strides = array<i32>} : memref<128x128xf32, #tpu.memory_space<vmem>>, vector<128x128xf32>,
    return
  }
  func.func @transform_0(%arg0: i32) -> (i32, i32) {
    %c0_i32 = arith.constant 0 : i32
    %c0_i32_0 = arith.constant 0 : i32
    %c0_i32_1 = arith.constant 0 : i32
    return %c0_i32, %c0_i32_0 : i32, i32
  }
  func.func @transform_1(%arg0: i32) -> (i32, i32) {
    %c0_i32 = arith.constant 0 : i32
    %c0_i32_0 = arith.constant 0 : i32
    %c0_i32_1 = arith.constant 0 : i32
    return %c0_i32, %c0_i32_0 : i32, i32
  }
  func.func @transform_2(%arg0: i32) -> (i32, i32) {
    %c0_i32 = arith.constant 0 : i32
    %c0_i32_0 = arith.constant 0 : i32
    %c0_i32_1 = arith.constant 0 : i32
    return %c0_i32, %c0_i32_0 : i32, i32
  }
}

</mosaic_0001>

<llo_original>
// kernel: tpu_custom_call.1
$region0: #{tpu_custom_call.1}
  #allocation0 [shape = 'u32[]', space=smem, size = 0x4, offset = 0x4, fixed_abs, tag = 'smem constant byte address 0x4 - core index']
  #allocation1 [shape = 'u32[144,128]{1,0:T(1,128)}', space=vmem, size = 0x12000, scoped, tag = 'internal scratch']
  %s0 = inlined_call_operand.hbm [shape: bf16[128,128], index: 0, kind: input, shape index: {}]
  %s1 = inlined_call_operand.hbm [shape: f32[128,128], index: 1, kind: input, shape index: {}]
  %s2 = inlined_call_operand.hbm [shape: f32[128,128], index: 2, kind: output, shape index: {}]
  %s3 = sld [smem:[#allocation0]]
  $region26: #{tpu_custom_call.1} parent=0
    _
  %s5 = ssub.s32 1, %s3
  %s6 = scalar_select 0, %s5, %s3
  $region1: #{tpu_custom_call.1} parent=0
    #allocation2 [shape = 'u8[32768]{0}', space=vmem, size = 0x8000, scoped, tag = 'input window, operand 0, single buffered']
    #allocation3 [shape = 's32[1]{0}', space=sflag, size = 0x4, scoped, tag = 'scoped memory for tpu_custom_call.1']
    #allocation4 [shape = 's32[1]{0}', space=sflag, size = 0x4, scoped, tag = 'scoped memory for tpu_custom_call.1']
    #allocation5 [shape = 'u8[65536]{0}', space=vmem, size = 0x10000, scoped, tag = 'input window, operand 1, single buffered']
    #allocation6 [shape = 's32[1]{0}', space=sflag, size = 0x4, scoped, tag = 'scoped memory for tpu_custom_call.1']
    #allocation7 [shape = 'u8[65536]{0}', space=vmem, size = 0x10000, scoped, tag = 'output window, operand 0, single buffered']
    %7 = vsyncpa [#allocation3], 0
    %8 = vsyncpa [#allocation6], 0
    %9 = vsyncpa [#allocation4], 0
    // Predicated region
    $region2: #{tpu_custom_call.1} parent=1 // pred_check
      _
    $region3: #{tpu_custom_call.1} parent=1 // pred_check_branch
      %11 = sbr.rel (0) target = $region5
    $region4: #{tpu_custom_call.1} parent=1 // pred_region
      %s13 = ssub.s32 1024, 1024
      %14 = vsyncadd [#allocation3], %s13
      %s15 = sshll.u32 [#allocation2], 4
      %s16 = int_to_ptr.vmem [resolvable:$true] %s15
      %21 = dma.hbm_to_vmem [thread:$0]  %s0, 1024, %s16, [#allocation3], 64, 64, 4
    $region5: #{tpu_custom_call.1} parent=1 // pred_fallthru
      _
    // Predicated region
    $region6: #{tpu_custom_call.1} parent=1 // pred_check
      _
    $region7: #{tpu_custom_call.1} parent=1 // pred_check_branch
      %23 = sbr.rel (0) target = $region9
    $region8: #{tpu_custom_call.1} parent=1 // pred_region
      %s25 = ssub.s32 2048, 2048
      %26 = vsyncadd [#allocation6], %s25
      %s27 = sshll.u32 [#allocation5], 4
      %s28 = int_to_ptr.vmem [resolvable:$true] %s27
      %33 = dma.hbm_to_vmem [thread:$0]  %s1, 2048, %s28, [#allocation6], 128, 128, 8
    $region9: #{tpu_custom_call.1} parent=1 // pred_fallthru
      _
    // Predicated region
    $region10: #{tpu_custom_call.1} parent=1 // pred_check
      _
    $region11: #{tpu_custom_call.1} parent=1 // pred_check_branch
      %35 = sbr.rel (0) target = $region13
    $region12: #{tpu_custom_call.1} parent=1 // pred_region
      %36 = dma.done [#allocation3], 1024
    $region13: #{tpu_custom_call.1} parent=1 // pred_fallthru
      _
    // Predicated region
    $region14: #{tpu_custom_call.1} parent=1 // pred_check
      _
    $region15: #{tpu_custom_call.1} parent=1 // pred_check_branch
      %38 = sbr.rel (0) target = $region17
    $region16: #{tpu_custom_call.1} parent=1 // pred_region
      %39 = dma.done [#allocation6], 2048
    $region17: #{tpu_custom_call.1} parent=1 // pred_fallthru
      _
    %v41 = vld [vmem:[#allocation2] sm:$0xf]
    %v42 = vld [vmem:[#allocation2 + $0x4] sm:$0xf]
    %v43 = vld [vmem:[#allocation2 + $0x8] sm:$0xf]
    %v44 = vld [vmem:[#allocation2 + $0xc] sm:$0xf]
    %v45 = vld [vmem:[#allocation2 + $0x10] sm:$0xf]
    %v46 = vld [vmem:[#allocation2 + $0x14] sm:$0xf]
    %v47 = vld [vmem:[#allocation2 + $0x18] sm:$0xf]
    %v48 = vld [vmem:[#allocation2 + $0x1c] sm:$0xf]
    %v49 = vld [vmem:[#allocation2 + $0x20] sm:$0xf]
    %v50 = vld [vmem:[#allocation2 + $0x24] sm:$0xf]
    %v51 = vld [vmem:[#allocation2 + $0x28] sm:$0xf]
    %v52 = vld [vmem:[#allocation2 + $0x2c] sm:$0xf]
    %v53 = vld [vmem:[#allocation2 + $0x30] sm:$0xf]
    %v54 = vld [vmem:[#allocation2 + $0x34] sm:$0xf]
    %v55 = vld [vmem:[#allocation2 + $0x38] sm:$0xf]
    %v56 = vld [vmem:[#allocation2 + $0x3c] sm:$0xf]
    %v57 = vld [vmem:[#allocation5] sm:$0xff]
    %v58 = vld [vmem:[#allocation5 + $0x8] sm:$0xff]
    %v59 = vld [vmem:[#allocation5 + $0x10] sm:$0xff]
    %v60 = vld [vmem:[#allocation5 + $0x18] sm:$0xff]
    %v61 = vld [vmem:[#allocation5 + $0x20] sm:$0xff]
    %v62 = vld [vmem:[#allocation5 + $0x28] sm:$0xff]
    %v63 = vld [vmem:[#allocation5 + $0x30] sm:$0xff]
    %v64 = vld [vmem:[#allocation5 + $0x38] sm:$0xff]
    %v65 = vld [vmem:[#allocation5 + $0x40] sm:$0xff]
    %v66 = vld [vmem:[#allocation5 + $0x48] sm:$0xff]
    %v67 = vld [vmem:[#allocation5 + $0x50] sm:$0xff]
    %v68 = vld [vmem:[#allocation5 + $0x58] sm:$0xff]
    %v69 = vld [vmem:[#allocation5 + $0x60] sm:$0xff]
    %v70 = vld [vmem:[#allocation5 + $0x68] sm:$0xff]
    %v71 = vld [vmem:[#allocation5 + $0x70] sm:$0xff]
    %v72 = vld [vmem:[#allocation5 + $0x78] sm:$0xff]
    %v73 = vpack.c.bf16 %v58, %v57
    %v74 = vpack.c.bf16 %v60, %v59
    %v75 = vpack.c.bf16 %v62, %v61
    %v76 = vpack.c.bf16 %v64, %v63
    %v77 = vpack.c.bf16 %v66, %v65
    %v78 = vpack.c.bf16 %v68, %v67
    %v79 = vpack.c.bf16 %v70, %v69
    %v80 = vpack.c.bf16 %v72, %v71
    %v97 = vunpack.c.l.b16 %v41
    %v98 = vunpack.c.l.b16 %v42
    %v99 = vunpack.c.l.b16 %v43
    %v100 = vunpack.c.l.b16 %v44
    %v101 = vunpack.c.l.b16 %v45
    %v102 = vunpack.c.l.b16 %v46
    %v103 = vunpack.c.l.b16 %v47
    %v104 = vunpack.c.l.b16 %v48
    %v105 = vunpack.c.l.b16 %v49
    %v106 = vunpack.c.l.b16 %v50
    %v107 = vunpack.c.l.b16 %v51
    %v108 = vunpack.c.l.b16 %v52
    %v109 = vunpack.c.l.b16 %v53
    %v110 = vunpack.c.l.b16 %v54
    %v111 = vunpack.c.l.b16 %v55
    %v112 = vunpack.c.l.b16 %v56
    %v113 = vpack.c.b16 %v98, %v97
    %v114 = vpack.c.b16 %v100, %v99
    %v115 = vpack.c.b16 %v102, %v101
    %v116 = vpack.c.b16 %v104, %v103
    %v117 = vpack.c.b16 %v106, %v105
    %v118 = vpack.c.b16 %v108, %v107
    %v119 = vpack.c.b16 %v110, %v109
    %v120 = vpack.c.b16 %v112, %v111
    %129 = vmatprep.subr.bf16.mxu0 0
    %130 = vmatpush1.bf16.msra.mxu0 %v73
    %131 = vmatprep.subr.bf16.mxu0 0
    %132 = vmatpush1.bf16.msra.mxu0 %v74
    %133 = vmatprep.subr.bf16.mxu0 0
    %134 = vmatpush1.bf16.msra.mxu0 %v75
    %135 = vmatprep.subr.bf16.mxu0 0
    %136 = vmatpush1.bf16.msra.mxu0 %v76
    %137 = vmatprep.subr.bf16.mxu0 0
    %138 = vmatpush1.bf16.msra.mxu0 %v77
    %139 = vmatprep.subr.bf16.mxu0 0
    %140 = vmatpush1.bf16.msra.mxu0 %v78
    %141 = vmatprep.subr.bf16.mxu0 0
    %142 = vmatpush1.bf16.msra.mxu0 %v79
    %143 = vmatprep.subr.bf16.mxu0 0
    %144 = vmatpush1.bf16.msra.mxu0 %v80
    %145 = vmatprep.subr.bf16.mxu0 0
    %146 = vmatpush1.bf16.msra.mxu0 0
    %147 = vmatprep.subr.bf16.mxu0 0
    %148 = vmatpush1.bf16.msra.mxu0 0
    %149 = vmatprep.subr.bf16.mxu0 0
    %150 = vmatpush1.bf16.msra.mxu0 0
    %151 = vmatprep.subr.bf16.mxu0 0
    %152 = vmatpush1.bf16.msra.mxu0 0
    %153 = vmatprep.subr.bf16.mxu0 0
    %154 = vmatpush1.bf16.msra.mxu0 0
    %155 = vmatprep.subr.bf16.mxu0 0
    %156 = vmatpush1.bf16.msra.mxu0 0
    %157 = vmatprep.subr.bf16.mxu0 0
    %158 = vmatpush1.bf16.msra.mxu0 0
    %159 = vmatprep.subr.bf16.mxu0 0
    %160 = vmatpush1.bf16.msra.mxu0 0
    %161 = vmatprep.mubr.bf16.mxu0 0
    %162 = vmatmul.mubr.bf16.gmra.mrb[0].mxu0 %v113
    %v163 = vpop.f32.mrb[0].mxu0
    %v164 = vadd.f32 0.0, %v163
    %v165 = vpop.f32.mrb[0].mxu0
    %v166 = vpop.f32.mrb[0].mxu0
    %v167 = vadd.f32 0.0, %v166
    %v168 = vpop.f32.mrb[0].mxu0
    %169 = vmatprep.mubr.bf16.mxu0 0
    %170 = vmatmul.mubr.bf16.gmra.mrb[0].mxu0 %v114
    %v171 = vpop.f32.mrb[0].mxu0
    %v172 = vadd.f32 0.0, %v171
    %v173 = vpop.f32.mrb[0].mxu0
    %v174 = vpop.f32.mrb[0].mxu0
    %v175 = vadd.f32 0.0, %v174
    %v176 = vpop.f32.mrb[0].mxu0
    %177 = vmatprep.mubr.bf16.mxu0 0
    %178 = vmatmul.mubr.bf16.gmra.mrb[0].mxu0 %v115
    %v179 = vpop.f32.mrb[0].mxu0
    %v180 = vadd.f32 0.0, %v179
    %v181 = vpop.f32.mrb[0].mxu0
    %v182 = vpop.f32.mrb[0].mxu0
    %v183 = vadd.f32 0.0, %v182
    %v184 = vpop.f32.mrb[0].mxu0
    %185 = vmatprep.mubr.bf16.mxu0 0
    %186 = vmatmul.mubr.bf16.gmra.mrb[0].mxu0 %v116
    %v187 = vpop.f32.mrb[0].mxu0
    %v188 = vadd.f32 0.0, %v187
    %v189 = vpop.f32.mrb[0].mxu0
    %v190 = vpop.f32.mrb[0].mxu0
    %v191 = vadd.f32 0.0, %v190
    %v192 = vpop.f32.mrb[0].mxu0
    %193 = vmatprep.mubr.bf16.mxu0 0
    %194 = vmatmul.mubr.bf16.gmra.mrb[0].mxu0 %v117
    %v195 = vpop.f32.mrb[0].mxu0
    %v196 = vadd.f32 0.0, %v195
    %v197 = vpop.f32.mrb[0].mxu0
    %v198 = vpop.f32.mrb[0].mxu0
    %v199 = vadd.f32 0.0, %v198
    %v200 = vpop.f32.mrb[0].mxu0
    %201 = vmatprep.mubr.bf16.mxu0 0
    %202 = vmatmul.mubr.bf16.gmra.mrb[0].mxu0 %v118
    %v203 = vpop.f32.mrb[0].mxu0
    %v204 = vadd.f32 0.0, %v203
    %v205 = vpop.f32.mrb[0].mxu0
    %v206 = vpop.f32.mrb[0].mxu0
    %v207 = vadd.f32 0.0, %v206
    %v208 = vpop.f32.mrb[0].mxu0
    %209 = vmatprep.mubr.bf16.mxu0 0
    %210 = vmatmul.mubr.bf16.gmra.mrb[0].mxu0 %v119
    %v211 = vpop.f32.mrb[0].mxu0
    %v212 = vadd.f32 0.0, %v211
    %v213 = vpop.f32.mrb[0].mxu0
    %v214 = vpop.f32.mrb[0].mxu0
    %v215 = vadd.f32 0.0, %v214
    %v216 = vpop.f32.mrb[0].mxu0
    %217 = vmatprep.mubr.bf16.mxu0 0
    %218 = vmatmul.mubr.bf16.gmra.mrb[0].mxu0 %v120
    %v219 = vpop.f32.mrb[0].mxu0
    %v220 = vadd.f32 0.0, %v219
    %v221 = vpop.f32.mrb[0].mxu0
    %v222 = vpop.f32.mrb[0].mxu0
    %v223 = vadd.f32 0.0, %v222
    %v224 = vpop.f32.mrb[0].mxu0
    %225 = vdwg.mxu0
    %v226 = vadd.f32 %v57, %v164
    %v227 = vadd.f32 %v58, %v167
    %v228 = vadd.f32 %v59, %v172
    %v229 = vadd.f32 %v60, %v175
    %v230 = vadd.f32 %v61, %v180
    %v231 = vadd.f32 %v62, %v183
    %v232 = vadd.f32 %v63, %v188
    %v233 = vadd.f32 %v64, %v191
    %v234 = vadd.f32 %v65, %v196
    %v235 = vadd.f32 %v66, %v199
    %v236 = vadd.f32 %v67, %v204
    %v237 = vadd.f32 %v68, %v207
    %v238 = vadd.f32 %v69, %v212
    %v239 = vadd.f32 %v70, %v215
    %v240 = vadd.f32 %v71, %v220
    %v241 = vadd.f32 %v72, %v223
    %v242 = vpack.c.bf16 %v167, %v164
    %v243 = vpack.c.bf16 %v175, %v172
    %v244 = vpack.c.bf16 %v183, %v180
    %v245 = vpack.c.bf16 %v191, %v188
    %v246 = vpack.c.bf16 %v199, %v196
    %v247 = vpack.c.bf16 %v207, %v204
    %v248 = vpack.c.bf16 %v215, %v212
    %v249 = vpack.c.bf16 %v223, %v220
    %250 = vmatprep.subr.bf16.mxu0 0
    %251 = vmatpush1.bf16.msra.mxu0 %v242
    %252 = vmatprep.subr.bf16.mxu0 0
    %253 = vmatpush1.bf16.msra.mxu0 %v243
    %254 = vmatprep.subr.bf16.mxu0 0
    %255 = vmatpush1.bf16.msra.mxu0 %v244
    %256 = vmatprep.subr.bf16.mxu0 0
    %257 = vmatpush1.bf16.msra.mxu0 %v245
    %258 = vmatprep.subr.bf16.mxu0 0
    %259 = vmatpush1.bf16.msra.mxu0 %v246
    %260 = vmatprep.subr.bf16.mxu0 0
    %261 = vmatpush1.bf16.msra.mxu0 %v247
    %262 = vmatprep.subr.bf16.mxu0 0
    %263 = vmatpush1.bf16.msra.mxu0 %v248
    %264 = vmatprep.subr.bf16.mxu0 0
    %265 = vmatpush1.bf16.msra.mxu0 %v249
    %266 = vmatprep.subr.bf16.mxu0 0
    %267 = vmatpush1.bf16.msra.mxu0 0
    %268 = vmatprep.subr.bf16.mxu0 0
    %269 = vmatpush1.bf16.msra.mxu0 0
    %270 = vmatprep.subr.bf16.mxu0 0
    %271 = vmatpush1.bf16.msra.mxu0 0
    %272 = vmatprep.subr.bf16.mxu0 0
    %273 = vmatpush1.bf16.msra.mxu0 0
    %274 = vmatprep.subr.bf16.mxu0 0
    %275 = vmatpush1.bf16.msra.mxu0 0
    %276 = vmatprep.subr.bf16.mxu0 0
    %277 = vmatpush1.bf16.msra.mxu0 0
    %278 = vmatprep.subr.bf16.mxu0 0
    %279 = vmatpush1.bf16.msra.mxu0 0
    %280 = vmatprep.subr.bf16.mxu0 0
    %281 = vmatpush1.bf16.msra.mxu0 0
    %282 = vmatprep.mubr.bf16.mxu0 0
    %283 = vmatmul.mubr.bf16.gmra.mrb[0].mxu0 %v113
    %v284 = vpop.f32.mrb[0].mxu0
    %v285 = vadd.f32 0.0, %v284
    %v286 = vpop.f32.mrb[0].mxu0
    %v287 = vpop.f32.mrb[0].mxu0
    %v288 = vadd.f32 0.0, %v287
    %v289 = vpop.f32.mrb[0].mxu0
    %290 = vmatprep.mubr.bf16.mxu0 0
    %291 = vmatmul.mubr.bf16.gmra.mrb[0].mxu0 %v114
    %v292 = vpop.f32.mrb[0].mxu0
    %v293 = vadd.f32 0.0, %v292
    %v294 = vpop.f32.mrb[0].mxu0
    %v295 = vpop.f32.mrb[0].mxu0
    %v296 = vadd.f32 0.0, %v295
    %v297 = vpop.f32.mrb[0].mxu0
    %298 = vmatprep.mubr.bf16.mxu0 0
    %299 = vmatmul.mubr.bf16.gmra.mrb[0].mxu0 %v115
    %v300 = vpop.f32.mrb[0].mxu0
    %v301 = vadd.f32 0.0, %v300
    %v302 = vpop.f32.mrb[0].mxu0
    %v303 = vpop.f32.mrb[0].mxu0
    %v304 = vadd.f32 0.0, %v303
    %v305 = vpop.f32.mrb[0].mxu0
    %306 = vmatprep.mubr.bf16.mxu0 0
    %307 = vmatmul.mubr.bf16.gmra.mrb[0].mxu0 %v116
    %v308 = vpop.f32.mrb[0].mxu0
    %v309 = vadd.f32 0.0, %v308
    %v310 = vpop.f32.mrb[0].mxu0
    %v311 = vpop.f32.mrb[0].mxu0
    %v312 = vadd.f32 0.0, %v311
    %v313 = vpop.f32.mrb[0].mxu0
    %314 = vmatprep.mubr.bf16.mxu0 0
    %315 = vmatmul.mubr.bf16.gmra.mrb[0].mxu0 %v117
    %v316 = vpop.f32.mrb[0].mxu0
    %v317 = vadd.f32 0.0, %v316
    %v318 = vpop.f32.mrb[0].mxu0
    %v319 = vpop.f32.mrb[0].mxu0
    %v320 = vadd.f32 0.0, %v319
    %v321 = vpop.f32.mrb[0].mxu0
    %322 = vmatprep.mubr.bf16.mxu0 0
    %323 = vmatmul.mubr.bf16.gmra.mrb[0].mxu0 %v118
    %v324 = vpop.f32.mrb[0].mxu0
    %v325 = vadd.f32 0.0, %v324
    %v326 = vpop.f32.mrb[0].mxu0
    %v327 = vpop.f32.mrb[0].mxu0
    %v328 = vadd.f32 0.0, %v327
    %v329 = vpop.f32.mrb[0].mxu0
    %330 = vmatprep.mubr.bf16.mxu0 0
    %331 = vmatmul.mubr.bf16.gmra.mrb[0].mxu0 %v119
    %v332 = vpop.f32.mrb[0].mxu0
    %v333 = vadd.f32 0.0, %v332
    %v334 = vpop.f32.mrb[0].mxu0
    %v335 = vpop.f32.mrb[0].mxu0
    %v336 = vadd.f32 0.0, %v335
    %v337 = vpop.f32.mrb[0].mxu0
    %338 = vmatprep.mubr.bf16.mxu0 0
    %339 = vmatmul.mubr.bf16.gmra.mrb[0].mxu0 %v120
    %v340 = vpop.f32.mrb[0].mxu0
    %v341 = vadd.f32 0.0, %v340
    %v342 = vpop.f32.mrb[0].mxu0
    %v343 = vpop.f32.mrb[0].mxu0
    %v344 = vadd.f32 0.0, %v343
    %v345 = vpop.f32.mrb[0].mxu0
    %346 = vdwg.mxu0
    %v347 = vadd.f32 %v226, %v285
    %v348 = vadd.f32 %v227, %v288
    %v349 = vadd.f32 %v228, %v293
    %v350 = vadd.f32 %v229, %v296
    %v351 = vadd.f32 %v230, %v301
    %v352 = vadd.f32 %v231, %v304
    %v353 = vadd.f32 %v232, %v309
    %v354 = vadd.f32 %v233, %v312
    %v355 = vadd.f32 %v234, %v317
    %v356 = vadd.f32 %v235, %v320
    %v357 = vadd.f32 %v236, %v325
    %v358 = vadd.f32 %v237, %v328
    %v359 = vadd.f32 %v238, %v333
    %v360 = vadd.f32 %v239, %v336
    %v361 = vadd.f32 %v240, %v341
    %v362 = vadd.f32 %v241, %v344
    %v363 = vpack.c.bf16 %v288, %v285
    %v364 = vpack.c.bf16 %v296, %v293
    %v365 = vpack.c.bf16 %v304, %v301
    %v366 = vpack.c.bf16 %v312, %v309
    %v367 = vpack.c.bf16 %v320, %v317
    %v368 = vpack.c.bf16 %v328, %v325
    %v369 = vpack.c.bf16 %v336, %v333
    %v370 = vpack.c.bf16 %v344, %v341
    %371 = vmatprep.subr.bf16.mxu0 0
    %372 = vmatpush1.bf16.msra.mxu0 %v363
    %373 = vmatprep.subr.bf16.mxu0 0
    %374 = vmatpush1.bf16.msra.mxu0 %v364
    %375 = vmatprep.subr.bf16.mxu0 0
    %376 = vmatpush1.bf16.msra.mxu0 %v365
    %377 = vmatprep.subr.bf16.mxu0 0
    %378 = vmatpush1.bf16.msra.mxu0 %v366
    %379 = vmatprep.subr.bf16.mxu0 0
    %380 = vmatpush1.bf16.msra.mxu0 %v367
    %381 = vmatprep.subr.bf16.mxu0 0
    %382 = vmatpush1.bf16.msra.mxu0 %v368
    %383 = vmatprep.subr.bf16.mxu0 0
    %384 = vmatpush1.bf16.msra.mxu0 %v369
    %385 = vmatprep.subr.bf16.mxu0 0
    %386 = vmatpush1.bf16.msra.mxu0 %v370
    %387 = vmatprep.subr.bf16.mxu0 0
    %388 = vmatpush1.bf16.msra.mxu0 0
    %389 = vmatprep.subr.bf16.mxu0 0
    %390 = vmatpush1.bf16.msra.mxu0 0
    %391 = vmatprep.subr.bf16.mxu0 0
    %392 = vmatpush1.bf16.msra.mxu0 0
    %393 = vmatprep.subr.bf16.mxu0 0
    %394 = vmatpush1.bf16.msra.mxu0 0
    %395 = vmatprep.subr.bf16.mxu0 0
    %396 = vmatpush1.bf16.msra.mxu0 0
    %397 = vmatprep.subr.bf16.mxu0 0
    %398 = vmatpush1.bf16.msra.mxu0 0
    %399 = vmatprep.subr.bf16.mxu0 0
    %400 = vmatpush1.bf16.msra.mxu0 0
    %401 = vmatprep.subr.bf16.mxu0 0
    %402 = vmatpush1.bf16.msra.mxu0 0
    %403 = vmatprep.mubr.bf16.mxu0 0
    %404 = vmatmul.mubr.bf16.gmra.mrb[0].mxu0 %v113
    %v405 = vpop.f32.mrb[0].mxu0
    %v406 = vadd.f32 0.0, %v405
    %v407 = vpop.f32.mrb[0].mxu0
    %v408 = vpop.f32.mrb[0].mxu0
    %v409 = vadd.f32 0.0, %v408
    %v410 = vpop.f32.mrb[0].mxu0
    %411 = vmatprep.mubr.bf16.mxu0 0
    %412 = vmatmul.mubr.bf16.gmra.mrb[0].mxu0 %v114
    %v413 = vpop.f32.mrb[0].mxu0
    %v414 = vadd.f32 0.0, %v413
    %v415 = vpop.f32.mrb[0].mxu0
    %v416 = vpop.f32.mrb[0].mxu0
    %v417 = vadd.f32 0.0, %v416
    %v418 = vpop.f32.mrb[0].mxu0
    %419 = vmatprep.mubr.bf16.mxu0 0
    %420 = vmatmul.mubr.bf16.gmra.mrb[0].mxu0 %v115
    %v421 = vpop.f32.mrb[0].mxu0
    %v422 = vadd.f32 0.0, %v421
    %v423 = vpop.f32.mrb[0].mxu0
    %v424 = vpop.f32.mrb[0].mxu0
    %v425 = vadd.f32 0.0, %v424
    %v426 = vpop.f32.mrb[0].mxu0
    %427 = vmatprep.mubr.bf16.mxu0 0
    %428 = vmatmul.mubr.bf16.gmra.mrb[0].mxu0 %v116
    %v429 = vpop.f32.mrb[0].mxu0
    %v430 = vadd.f32 0.0, %v429
    %v431 = vpop.f32.mrb[0].mxu0
    %v432 = vpop.f32.mrb[0].mxu0
    %v433 = vadd.f32 0.0, %v432
    %v434 = vpop.f32.mrb[0].mxu0
    %435 = vmatprep.mubr.bf16.mxu0 0
    %436 = vmatmul.mubr.bf16.gmra.mrb[0].mxu0 %v117
    %v437 = vpop.f32.mrb[0].mxu0
    %v438 = vadd.f32 0.0, %v437
    %v439 = vpop.f32.mrb[0].mxu0
    %v440 = vpop.f32.mrb[0].mxu0
    %v441 = vadd.f32 0.0, %v440
    %v442 = vpop.f32.mrb[0].mxu0
    %443 = vmatprep.mubr.bf16.mxu0 0
    %444 = vmatmul.mubr.bf16.gmra.mrb[0].mxu0 %v118
    %v445 = vpop.f32.mrb[0].mxu0
    %v446 = vadd.f32 0.0, %v445
    %v447 = vpop.f32.mrb[0].mxu0
    %v448 = vpop.f32.mrb[0].mxu0
    %v449 = vadd.f32 0.0, %v448
    %v450 = vpop.f32.mrb[0].mxu0
    %451 = vmatprep.mubr.bf16.mxu0 0
    %452 = vmatmul.mubr.bf16.gmra.mrb[0].mxu0 %v119
    %v453 = vpop.f32.mrb[0].mxu0
    %v454 = vadd.f32 0.0, %v453
    %v455 = vpop.f32.mrb[0].mxu0
    %v456 = vpop.f32.mrb[0].mxu0
    %v457 = vadd.f32 0.0, %v456
    %v458 = vpop.f32.mrb[0].mxu0
    %459 = vmatprep.mubr.bf16.mxu0 0
    %460 = vmatmul.mubr.bf16.gmra.mrb[0].mxu0 %v120
    %v461 = vpop.f32.mrb[0].mxu0
    %v462 = vadd.f32 0.0, %v461
    %v463 = vpop.f32.mrb[0].mxu0
    %v464 = vpop.f32.mrb[0].mxu0
    %v465 = vadd.f32 0.0, %v464
    %v466 = vpop.f32.mrb[0].mxu0
    %467 = vdwg.mxu0
    %v468 = vadd.f32 %v347, %v406
    %v469 = vadd.f32 %v348, %v409
    %v470 = vadd.f32 %v349, %v414
    %v471 = vadd.f32 %v350, %v417
    %v472 = vadd.f32 %v351, %v422
    %v473 = vadd.f32 %v352, %v425
    %v474 = vadd.f32 %v353, %v430
    %v475 = vadd.f32 %v354, %v433
    %v476 = vadd.f32 %v355, %v438
    %v477 = vadd.f32 %v356, %v441
    %v478 = vadd.f32 %v357, %v446
    %v479 = vadd.f32 %v358, %v449
    %v480 = vadd.f32 %v359, %v454
    %v481 = vadd.f32 %v360, %v457
    %v482 = vadd.f32 %v361, %v462
    %v483 = vadd.f32 %v362, %v465
    %484 = vst [vmem:[#allocation7] sm:$0xff] %v468
    %485 = vst [vmem:[#allocation7 + $0x8] sm:$0xff] %v469
    %486 = vst [vmem:[#allocation7 + $0x10] sm:$0xff] %v470
    %487 = vst [vmem:[#allocation7 + $0x18] sm:$0xff] %v471
    %488 = vst [vmem:[#allocation7 + $0x20] sm:$0xff] %v472
    %489 = vst [vmem:[#allocation7 + $0x28] sm:$0xff] %v473
    %490 = vst [vmem:[#allocation7 + $0x30] sm:$0xff] %v474
    %491 = vst [vmem:[#allocation7 + $0x38] sm:$0xff] %v475
    %492 = vst [vmem:[#allocation7 + $0x40] sm:$0xff] %v476
    %493 = vst [vmem:[#allocation7 + $0x48] sm:$0xff] %v477
    %494 = vst [vmem:[#allocation7 + $0x50] sm:$0xff] %v478
    %495 = vst [vmem:[#allocation7 + $0x58] sm:$0xff] %v479
    %496 = vst [vmem:[#allocation7 + $0x60] sm:$0xff] %v480
    %497 = vst [vmem:[#allocation7 + $0x68] sm:$0xff] %v481
    %498 = vst [vmem:[#allocation7 + $0x70] sm:$0xff] %v482
    %499 = vst [vmem:[#allocation7 + $0x78] sm:$0xff] %v483
    // Predicated region
    $region18: #{tpu_custom_call.1} parent=1 // pred_check
      _
    $region19: #{tpu_custom_call.1} parent=1 // pred_check_branch
      %501 = sbr.rel (0) target = $region21
    $region20: #{tpu_custom_call.1} parent=1 // pred_region
      %s503 = ssub.s32 2048, 2048
      %504 = vsyncadd [#allocation4], %s503
      %s505 = sshll.u32 [#allocation7], 4
      %s506 = int_to_ptr.vmem [resolvable:$true] %s505
      %511 = dma.vmem_to_hbm [thread:$0]  %s506, 2048, %s2, [#allocation4], 128, 128, 8
    $region21: #{tpu_custom_call.1} parent=1 // pred_fallthru
      _
    // Predicated region
    $region22: #{tpu_custom_call.1} parent=1 // pred_check
      _
    $region23: #{tpu_custom_call.1} parent=1 // pred_check_branch
      %513 = sbr.rel (0) target = $region25
    $region24: #{tpu_custom_call.1} parent=1 // pred_region
      %514 = dma.done [#allocation4], 2048
    $region25: #{tpu_custom_call.1} parent=1 // pred_fallthru
      _
    %515 = vsyncpa [#allocation3], 1
    %516 = vsyncpa [#allocation6], 1
    %517 = vsyncpa [#allocation4], 1

</llo_original>
